<compile_context>
chip_gen: v7x
topology: tpu7x:2x2x1
jax: 0.10.0
libtpu: 0.0.40
codegen_flags: <defaults>
</compile_context>

<pallas_src>
import jax
import jax.numpy as jnp
from jax import lax
from jax.experimental import pallas as pl
from jax.experimental.pallas import tpu as pltpu


def _round_up(v, m):
    return ((v + m - 1) // m) * m


# ----------------------------------------------------------------------------
# Pallas kernel
# ----------------------------------------------------------------------------
def _make_mlp_kernel(n_hidden, in_dim):
    """Fused kernel in transposed (feature, rows) orientation.

    Ref order:
      [alpha_smem]                       f32[n_hidden] in SMEM (if n_hidden>0)
      x_ref                              (in_dim, TM) lane-dense row tile
      w_0, b_0, ..., w_{n-1}, b_{n-1}    hidden weights (out,in), bias (out,1)
      w_head, b_head                     fused head (out_total,last), (out_total,1)
      o_ref                              (out_total, TM) lane-dense output tile
    """
    use_vpu_first_layer = in_dim <= 16  # tiny K: do layer 0 on the VPU

    def kernel(*refs):
        idx = 0
        if n_hidden > 0:
            alpha_ref = refs[idx]
            idx += 1
        x_ref = refs[idx]
        idx += 1

        x = x_ref[...].astype(jnp.float32)                 # (in_dim, TM)

        h = None
        for layer in range(n_hidden):
            w = refs[idx][...]                             # (hidden, last) f32
            b = refs[idx + 1][...]                         # (hidden, 1)
            idx += 2
            if layer == 0:
                if use_vpu_first_layer:
                    # K = in_dim is tiny: VPU broadcast-FMAs instead of an MXU
                    # pass that would waste ~K/256 of the systolic depth and
                    # compete for the saturating vector-extended slot.
                    acc = w[:, 0:1] * x[0:1, :]            # (hidden, TM)
                    for d in range(1, in_dim):
                        acc = acc + w[:, d:d + 1] * x[d:d + 1, :]
                    h = acc
                else:
                    h = jnp.dot(w.astype(jnp.bfloat16),
                                x.astype(jnp.bfloat16),
                                preferred_element_type=jnp.float32)
            else:
                h = jnp.dot(w.astype(jnp.bfloat16),
                            h.astype(jnp.bfloat16),
                            preferred_element_type=jnp.float32)
            h = h + b                                      # lane-broadcast bias
            alpha = alpha_ref[layer]                       # scalar from SMEM
            h = jnp.where(h > 0.0, h, alpha * h)           # PReLU (shared alpha)

        w_o = refs[idx][...]                               # (out_total, last)
        b_o = refs[idx + 1][...]                           # (out_total, 1)
        o_ref = refs[idx + 2]                              # (out_total, TM)
        src = x if n_hidden == 0 else h
        y = jnp.dot(w_o.astype(jnp.bfloat16),
                    src.astype(jnp.bfloat16),
                    preferred_element_type=jnp.float32)
        o_ref[...] = (y + b_o).astype(o_ref.dtype)

    return kernel


# ----------------------------------------------------------------------------
# Parameter construction (mirrors MLP.__init__/init_weights; PyTorch (out,in))
# ----------------------------------------------------------------------------
def init_mlp_params(key, in_dim, out_dim, hidden_list, mode):
    params = {"hidden": [], "mode": mode}
    lastv = in_dim
    for hidden in hidden_list:
        key, kw, kb = jax.random.split(key, 3)
        w = 0.01 * jax.random.normal(kw, (hidden, lastv), jnp.float32)
        bound = 1.0 / jnp.sqrt(jnp.float32(lastv))
        b = jax.random.uniform(kb, (hidden, 1), jnp.float32, -bound, bound)
        alpha = jnp.float32(0.25)                          # nn.PReLU init 0.25
        params["hidden"].append((w, b, alpha))
        lastv = hidden

    def make_head(k):
        kw, kb = jax.random.split(k)
        w = 0.01 * jax.random.normal(kw, (out_dim, lastv), jnp.float32)
        bound = 1.0 / jnp.sqrt(jnp.float32(lastv))
        b = jax.random.uniform(kb, (out_dim, 1), jnp.float32, -bound, bound)
        return w, b

    if mode == "gray":
        key, kh = jax.random.split(key)
        params["out"] = [make_head(kh)]
    else:  # rgb
        key, kr, kg, kb_ = jax.random.split(key, 4)
        params["out"] = [make_head(kr), make_head(kg), make_head(kb_)]
    return params


# ----------------------------------------------------------------------------
# Wrapper
# ----------------------------------------------------------------------------
def mlp_forward(params, x, *, tm=16384, channel_major_out=False):
    """Forward pass matching PyTorch MLP.forward.

    If channel_major_out=True, returns the kernel-native (out_total, N) array
    (no wrapper transpose) for consumers that can take channel-major data —
    the final transpose otherwise roughly doubles end-to-end HBM traffic.
    """
    mode = params["mode"]
    lead_shape = x.shape[:-1]
    in_dim = x.shape[-1]
    n = 1
    for s in lead_shape:
        n *= s
    # Present x lane-dense as (in_dim, N): contiguous DMA bursts, no padding
    # blow-up.  This single transpose typically fuses into x's producer.
    x2 = x.reshape(n, in_dim).T                            # (in_dim, n)

    n_hidden = len(params["hidden"])
    out_dim = params["out"][0][0].shape[0]
    n_heads = 1 if mode == "gray" else 3
    out_total = n_heads * out_dim

    # Row tile: multiple of 128 (lane dim of both the x block and the output).
    tm_eff = min(tm, _round_up(n, 128))
    min_steps = 4  # >=2 steps per TensorCore on v7x; harmless on v5e/v6e
    if n > min_steps * 128 and pl.cdiv(n, tm_eff) < min_steps:
        tm_eff = _round_up(pl.cdiv(n, min_steps), 128)
    grid = (pl.cdiv(n, tm_eff),)

    inputs = []
    in_specs = []

    if n_hidden > 0:
        alphas = jnp.stack([a for (_, _, a) in params["hidden"]]).astype(jnp.float32)
        inputs.append(alphas)
        in_specs.append(pl.BlockSpec(memory_space=pltpu.MemorySpace.SMEM))

    inputs.append(x2)
    in_specs.append(pl.BlockSpec((in_dim, tm_eff), lambda i: (0, i)))

    def full_spec(arr):
        nd = arr.ndim
        return pl.BlockSpec(arr.shape, lambda i, nd=nd: (0,) * nd)

    for w, b, _ in params["hidden"]:
        inputs += [w, b]
        in_specs += [full_spec(w), full_spec(b)]

    # Fuse the head(s) into a single (out_total, last) matmul + one output stream.
    w_head = jnp.concatenate([w for (w, _) in params["out"]], axis=0)
    b_head = jnp.concatenate([b for (_, b) in params["out"]], axis=0)
    inputs += [w_head, b_head]
    in_specs += [full_spec(w_head), full_spec(b_head)]

    out_shape = jax.ShapeDtypeStruct((out_total, n), x.dtype)
    out_specs = pl.BlockSpec((out_total, tm_eff), lambda i: (0, i))

    kernel = _make_mlp_kernel(n_hidden, in_dim)

    result = pl.pallas_call(
        kernel,
        out_shape=out_shape,
        grid_spec=pltpu.PrefetchScalarGridSpec(
            num_scalar_prefetch=0,
            grid=grid,
            in_specs=in_specs,
            out_specs=out_specs,
        ),
        compiler_params=pltpu.CompilerParams(
            dimension_semantics=("parallel",),
            vmem_limit_bytes=32 * 1024 * 1024,
        ),
    )(*inputs)

    if channel_major_out:
        return result                                      # (out_total, n)

    # Transpose only to match the PyTorch (rows, channels) output layout.
    y = result.T                                           # (n, out_total)
    if mode == "gray":
        return y.reshape(*lead_shape, out_dim)
    return y.reshape(*lead_shape, 3, out_dim)


# ----------------------------------------------------------------------------
# Pure-JAX reference for validation
# ----------------------------------------------------------------------------
def mlp_reference(params, x):
    mode = params["mode"]
    lead_shape = x.shape[:-1]
    h = x.reshape(-1, x.shape[-1]).astype(jnp.float32)
    for w, b, a in params["hidden"]:
        h = h @ w.T + b[:, 0]
        h = jnp.where(h > 0.0, h, a * h)
    outs = [h @ w.T + b[:, 0] for (w, b) in params["out"]]
    if mode == "gray":
        return outs[0].reshape(*lead_shape, -1)
    y = jnp.stack(outs, axis=-2)
    return y.reshape(*lead_shape, 3, y.shape[-1])


if __name__ == "__main__":
    key = jax.random.PRNGKey(0)
    k_x, k_x2, k_x3, k_pr, k_pg = jax.random.split(key, 5)

    in_dim, hidden_list = 4, [32, 32]
    # bf16 MXU operands (f32 accumulation) -> slightly looser tolerance vs f32 ref.
    TOL = dict(atol=5e-3, rtol=5e-3)

    # rgb mode: N = 2*64 = 128 rows (single grid step)
    x = jax.random.normal(k_x, (2, 64, in_dim), jnp.float32)
    params_rgb = init_mlp_params(k_pr, in_dim, 1, hidden_list, "rgb")
    out_rgb = jax.block_until_ready(mlp_forward(params_rgb, x))
    ref_rgb = mlp_reference(params_rgb, x)
    assert out_rgb.shape == (2, 64, 3, 1), out_rgb.shape
    assert jnp.allclose(out_rgb, ref_rgb, **TOL)

    # gray mode on a row count that is NOT 128-aligned (exercises the masked
    # boundary block that replaced the wrapper-side jnp.pad copy)
    x_ragged = jax.random.normal(k_x2, (3, 50, in_dim), jnp.float32)  # N = 150
    params_gray = init_mlp_params(k_pg, in_dim, 3, hidden_list, "gray")
    out_gray = jax.block_until_ready(mlp_forward(params_gray, x_ragged))
    ref_gray = mlp_reference(params_gray, x_ragged)
    assert out_gray.shape == (3, 50, 3), out_gray.shape
    assert jnp.allclose(out_gray, ref_gray, **TOL)

    # rgb mode with enough rows to force a multi-step grid (>= 4 steps)
    x_big = jax.random.normal(k_x3, (8, 256, in_dim), jnp.float32)    # N = 2048
    out_big = jax.block_until_ready(mlp_forward(params_rgb, x_big))
    ref_big = mlp_reference(params_rgb, x_big)
    assert out_big.shape == (8, 256, 3, 1), out_big.shape
    assert jnp.allclose(out_big, ref_big, **TOL)

    print("KERNEL_OK")
</pallas_src>

<mosaic_0001>
module attributes {stable_mosaic.version = 11 : i64} {
  func.func @kernel(%arg0: i32, %arg1: memref<2xf32, #tpu.memory_space<smem>>, %arg2: memref<4x128xf32, #tpu.memory_space<vmem>>, %arg3: memref<32x4xf32, #tpu.memory_space<vmem>>, %arg4: memref<32x1xf32, #tpu.memory_space<vmem>>, %arg5: memref<32x32xf32, #tpu.memory_space<vmem>>, %arg6: memref<32x1xf32, #tpu.memory_space<vmem>>, %arg7: memref<3x32xf32, #tpu.memory_space<vmem>>, %arg8: memref<3x1xf32, #tpu.memory_space<vmem>>, %arg9: memref<3x128xf32, #tpu.memory_space<vmem>>) attributes {dimension_semantics = [#tpu.dimension_semantics<parallel>], iteration_bounds = array<i64: 1>, scalar_prefetch = 0 : i64, scratch_operands = 0 : i64, tpu.core_type = #tpu.core_type<tc>, window_params = [{transform_indices = @transform_0, window_bounds = array<i64: 2>}, {transform_indices = @transform_1, window_bounds = array<i64: 4, 128>}, {pipeline_mode = #tpu.pipeline_mode<synchronous>, transform_indices = @transform_2, window_bounds = array<i64: 32, 4>}, {pipeline_mode = #tpu.pipeline_mode<synchronous>, transform_indices = @transform_3, window_bounds = array<i64: 32, 1>}, {pipeline_mode = #tpu.pipeline_mode<synchronous>, transform_indices = @transform_4, window_bounds = array<i64: 32, 32>}, {pipeline_mode = #tpu.pipeline_mode<synchronous>, transform_indices = @transform_5, window_bounds = array<i64: 32, 1>}, {pipeline_mode = #tpu.pipeline_mode<synchronous>, transform_indices = @transform_6, window_bounds = array<i64: 3, 32>}, {pipeline_mode = #tpu.pipeline_mode<synchronous>, transform_indices = @transform_7, window_bounds = array<i64: 3, 1>}, {transform_indices = @transform_8, window_bounds = array<i64: 3, 128>}]} {
    %c0 = arith.constant 0 : index
    %c0_0 = arith.constant 0 : index
    %0 = vector.load %arg2[%c0, %c0_0] : memref<4x128xf32, #tpu.memory_space<vmem>>, vector<4x128xf32>
    %c0_1 = arith.constant 0 : index
    %c0_2 = arith.constant 0 : index
    %1 = vector.load %arg3[%c0_1, %c0_2] : memref<32x4xf32, #tpu.memory_space<vmem>>, vector<32x4xf32>
    %c0_3 = arith.constant 0 : index
    %c0_4 = arith.constant 0 : index
    %2 = vector.load %arg4[%c0_3, %c0_4] : memref<32x1xf32, #tpu.memory_space<vmem>>, vector<32x1xf32>
    %3 = vector.extract_strided_slice %1 {offsets = [0, 0], sizes = [32, 1], strides = [1, 1]} : vector<32x4xf32> to vector<32x1xf32>
    %4 = vector.extract_strided_slice %0 {offsets = [0, 0], sizes = [1, 128], strides = [1, 1]} : vector<4x128xf32> to vector<1x128xf32>
    %5 = vector.broadcast %3 : vector<32x1xf32> to vector<32x128xf32>
    %6 = vector.broadcast %4 : vector<1x128xf32> to vector<32x128xf32>
    %7 = arith.mulf %5, %6 : vector<32x128xf32>
    %8 = vector.extract_strided_slice %1 {offsets = [0, 1], sizes = [32, 1], strides = [1, 1]} : vector<32x4xf32> to vector<32x1xf32>
    %9 = vector.extract_strided_slice %0 {offsets = [1, 0], sizes = [1, 128], strides = [1, 1]} : vector<4x128xf32> to vector<1x128xf32>
    %10 = vector.broadcast %8 : vector<32x1xf32> to vector<32x128xf32>
    %11 = vector.broadcast %9 : vector<1x128xf32> to vector<32x128xf32>
    %12 = arith.mulf %10, %11 : vector<32x128xf32>
    %13 = arith.addf %7, %12 : vector<32x128xf32>
    %14 = vector.extract_strided_slice %1 {offsets = [0, 2], sizes = [32, 1], strides = [1, 1]} : vector<32x4xf32> to vector<32x1xf32>
    %15 = vector.extract_strided_slice %0 {offsets = [2, 0], sizes = [1, 128], strides = [1, 1]} : vector<4x128xf32> to vector<1x128xf32>
    %16 = vector.broadcast %14 : vector<32x1xf32> to vector<32x128xf32>
    %17 = vector.broadcast %15 : vector<1x128xf32> to vector<32x128xf32>
    %18 = arith.mulf %16, %17 : vector<32x128xf32>
    %19 = arith.addf %13, %18 : vector<32x128xf32>
    %20 = vector.extract_strided_slice %1 {offsets = [0, 3], sizes = [32, 1], strides = [1, 1]} : vector<32x4xf32> to vector<32x1xf32>
    %21 = vector.extract_strided_slice %0 {offsets = [3, 0], sizes = [1, 128], strides = [1, 1]} : vector<4x128xf32> to vector<1x128xf32>
    %22 = vector.broadcast %20 : vector<32x1xf32> to vector<32x128xf32>
    %23 = vector.broadcast %21 : vector<1x128xf32> to vector<32x128xf32>
    %24 = arith.mulf %22, %23 : vector<32x128xf32>
    %25 = arith.addf %19, %24 : vector<32x128xf32>
    %26 = vector.broadcast %2 : vector<32x1xf32> to vector<32x128xf32>
    %27 = arith.addf %25, %26 : vector<32x128xf32>
    %c0_5 = arith.constant 0 : index
    %28 = memref.load %arg1[%c0_5] : memref<2xf32, #tpu.memory_space<smem>>
    %cst = arith.constant 0.000000e+00 : f32
    %29 = vector.broadcast %cst : f32 to vector<32x128xf32>
    %30 = arith.cmpf ogt, %27, %29 : vector<32x128xf32>
    %31 = vector.broadcast %28 : f32 to vector<32x128xf32>
    %32 = arith.mulf %31, %27 : vector<32x128xf32>
    %33 = arith.select %30, %27, %32 : vector<32x128xi1>, vector<32x128xf32>
    %c0_6 = arith.constant 0 : index
    %c0_7 = arith.constant 0 : index
    %34 = vector.load %arg5[%c0_6, %c0_7] : memref<32x32xf32, #tpu.memory_space<vmem>>, vector<32x32xf32>
    %c0_8 = arith.constant 0 : index
    %c0_9 = arith.constant 0 : index
    %35 = vector.load %arg6[%c0_8, %c0_9] : memref<32x1xf32, #tpu.memory_space<vmem>>, vector<32x1xf32>
    %36 = arith.truncf %34 : vector<32x32xf32> to vector<32x32xbf16>
    %37 = arith.truncf %33 : vector<32x128xf32> to vector<32x128xbf16>
    %cst_10 = arith.constant dense<0.000000e+00> : vector<32x128xf32>
    %38 = tpu.matmul %36, %37, %cst_10 {dimension_numbers = #tpu.dot_dimension_numbers<[1], [0], [0], [1], [0, 0, 1, 1], [], []>} : vector<32x32xbf16>, vector<32x128xbf16>, vector<32x128xf32> -> vector<32x128xf32>
    %39 = vector.broadcast %35 : vector<32x1xf32> to vector<32x128xf32>
    %40 = arith.addf %38, %39 : vector<32x128xf32>
    %c1 = arith.constant 1 : index
    %41 = memref.load %arg1[%c1] : memref<2xf32, #tpu.memory_space<smem>>
    %cst_11 = arith.constant 0.000000e+00 : f32
    %42 = vector.broadcast %cst_11 : f32 to vector<32x128xf32>
    %43 = arith.cmpf ogt, %40, %42 : vector<32x128xf32>
    %44 = vector.broadcast %41 : f32 to vector<32x128xf32>
    %45 = arith.mulf %44, %40 : vector<32x128xf32>
    %46 = arith.select %43, %40, %45 : vector<32x128xi1>, vector<32x128xf32>
    %c0_12 = arith.constant 0 : index
    %c0_13 = arith.constant 0 : index
    %47 = vector.load %arg7[%c0_12, %c0_13] : memref<3x32xf32, #tpu.memory_space<vmem>>, vector<3x32xf32>
    %c0_14 = arith.constant 0 : index
    %c0_15 = arith.constant 0 : index
    %48 = vector.load %arg8[%c0_14, %c0_15] : memref<3x1xf32, #tpu.memory_space<vmem>>, vector<3x1xf32>
    %49 = arith.truncf %47 : vector<3x32xf32> to vector<3x32xbf16>
    %50 = arith.truncf %46 : vector<32x128xf32> to vector<32x128xbf16>
    %cst_16 = arith.constant dense<0.000000e+00> : vector<3x128xf32>
    %51 = tpu.matmul %49, %50, %cst_16 {dimension_numbers = #tpu.dot_dimension_numbers<[1], [0], [0], [1], [0, 0, 1, 1], [], []>} : vector<3x32xbf16>, vector<32x128xbf16>, vector<3x128xf32> -> vector<3x128xf32>
    %52 = vector.broadcast %48 : vector<3x1xf32> to vector<3x128xf32>
    %53 = arith.addf %51, %52 : vector<3x128xf32>
    %c0_17 = arith.constant 0 : index
    %c0_18 = arith.constant 0 : index
    %54 = vector.load %arg9[%c0_17, %c0_18] : memref<3x128xf32, #tpu.memory_space<vmem>>, vector<3x128xf32>
    tpu.vector_store %arg9[%c0_17, %c0_18], %53 {strides = array<i32>} : memref<3x128xf32, #tpu.memory_space<vmem>>, vector<3x128xf32>,
    return
  }
  func.func @transform_0(%arg0: i32) -> i32 {
    %c0_i32 = arith.constant 0 : i32
    %c0_i32_0 = arith.constant 0 : i32
    return %c0_i32 : i32
  }
  func.func @transform_1(%arg0: i32) -> (i32, i32) {
    %c0_i32 = arith.constant 0 : i32
    %c0_i32_0 = arith.constant 0 : i32
    return %c0_i32, %arg0 : i32, i32
  }
  func.func @transform_2(%arg0: i32) -> (i32, i32) {
    %c0_i32 = arith.constant 0 : i32
    %c0_i32_0 = arith.constant 0 : i32
    %c0_i32_1 = arith.constant 0 : i32
    return %c0_i32, %c0_i32_0 : i32, i32
  }
  func.func @transform_3(%arg0: i32) -> (i32, i32) {
    %c0_i32 = arith.constant 0 : i32
    %c0_i32_0 = arith.constant 0 : i32
    %c0_i32_1 = arith.constant 0 : i32
    return %c0_i32, %c0_i32_0 : i32, i32
  }
  func.func @transform_4(%arg0: i32) -> (i32, i32) {
    %c0_i32 = arith.constant 0 : i32
    %c0_i32_0 = arith.constant 0 : i32
    %c0_i32_1 = arith.constant 0 : i32
    return %c0_i32, %c0_i32_0 : i32, i32
  }
  func.func @transform_5(%arg0: i32) -> (i32, i32) {
    %c0_i32 = arith.constant 0 : i32
    %c0_i32_0 = arith.constant 0 : i32
    %c0_i32_1 = arith.constant 0 : i32
    return %c0_i32, %c0_i32_0 : i32, i32
  }
  func.func @transform_6(%arg0: i32) -> (i32, i32) {
    %c0_i32 = arith.constant 0 : i32
    %c0_i32_0 = arith.constant 0 : i32
    %c0_i32_1 = arith.constant 0 : i32
    return %c0_i32, %c0_i32_0 : i32, i32
  }
  func.func @transform_7(%arg0: i32) -> (i32, i32) {
    %c0_i32 = arith.constant 0 : i32
    %c0_i32_0 = arith.constant 0 : i32
    %c0_i32_1 = arith.constant 0 : i32
    return %c0_i32, %c0_i32_0 : i32, i32
  }
  func.func @transform_8(%arg0: i32) -> (i32, i32) {
    %c0_i32 = arith.constant 0 : i32
    %c0_i32_0 = arith.constant 0 : i32
    return %c0_i32, %arg0 : i32, i32
  }
}

</mosaic_0001>

<llo_original>
// kernel: tpu_custom_call.1
$region0: #{tpu_custom_call.1}
  #allocation0 [shape = 'u32[]', space=smem, size = 0x4, offset = 0x4, fixed_abs, tag = 'smem constant byte address 0x4 - core index']
  #allocation1 [shape = 'u32[144,128]{1,0:T(1,128)}', space=vmem, size = 0x12000, scoped, tag = 'internal scratch']
  %s0 = inlined_call_operand.vmem [shape: f32[2], index: 0, kind: input, shape index: {}]
  %s1 = inlined_call_operand.vmem [shape: f32[4,128], index: 1, kind: input, shape index: {}]
  %s2 = inlined_call_operand.vmem [shape: f32[32,4], index: 2, kind: input, shape index: {}]
  %s3 = inlined_call_operand.vmem [shape: f32[32,1], index: 3, kind: input, shape index: {}]
  %s4 = inlined_call_operand.vmem [shape: f32[32,32], index: 4, kind: input, shape index: {}]
  %s5 = inlined_call_operand.vmem [shape: f32[32,1], index: 5, kind: input, shape index: {}]
  %s6 = inlined_call_operand.vmem [shape: f32[3,32], index: 6, kind: input, shape index: {}]
  %s7 = inlined_call_operand.vmem [shape: f32[3,1], index: 7, kind: input, shape index: {}]
  %s8 = inlined_call_operand.hbm [shape: f32[3,128], index: 8, kind: output, shape index: {}]
  %s9 = sld [smem:[#allocation0]]
  $region46: #{tpu_custom_call.1} parent=0
    _
  %s11 = ssub.s32 1, %s9
  %s12 = scalar_select 0, %s11, %s9
  $region1: #{tpu_custom_call.1} parent=0
    #allocation2 [shape = 'u8[512]{0}', space=smem, size = 0x200, scoped, tag = 'input window, operand 0, single buffered']
    #allocation3 [shape = 's32[1]{0}', space=sflag, size = 0x4, scoped, tag = 'scoped memory for tpu_custom_call.1']
    #allocation4 [shape = 's32[1]{0}', space=sflag, size = 0x4, scoped, tag = 'scoped memory for tpu_custom_call.1']
    #allocation5 [shape = 'u8[2048]{0}', space=vmem, size = 0x800, scoped, tag = 'output window, operand 0, single buffered']
    %13 = vsyncpa [#allocation4], 0
    %14 = vsyncpa [#allocation3], 0
    // Predicated region
    $region2: #{tpu_custom_call.1} parent=1 // pred_check
      _
    $region3: #{tpu_custom_call.1} parent=1 // pred_check_branch
      %16 = sbr.rel (0) target = $region5
    $region4: #{tpu_custom_call.1} parent=1 // pred_region
      %s18 = ssub.s32 16, 16
      %19 = vsyncadd [#allocation4], %s18
      %s21 = sshll.u32 %s0, 4
      %s22 = int_to_ptr.vmem [resolvable:$true] %s21
      %24 = dma.vmem_to_smem %s22, 16, [#allocation2], [#allocation4]
    $region5: #{tpu_custom_call.1} parent=1 // pred_fallthru
      _
    // Predicated region
    $region6: #{tpu_custom_call.1} parent=1 // pred_check
      _
    $region7: #{tpu_custom_call.1} parent=1 // pred_check_branch
      %26 = sbr.rel (0) target = $region9
    $region8: #{tpu_custom_call.1} parent=1 // pred_region
      _
    $region9: #{tpu_custom_call.1} parent=1 // pred_fallthru
      _
    // Predicated region
    $region10: #{tpu_custom_call.1} parent=1 // pred_check
      _
    $region11: #{tpu_custom_call.1} parent=1 // pred_check_branch
      %28 = sbr.rel (0) target = $region13
    $region12: #{tpu_custom_call.1} parent=1 // pred_region
      _
    $region13: #{tpu_custom_call.1} parent=1 // pred_fallthru
      _
    // Predicated region
    $region14: #{tpu_custom_call.1} parent=1 // pred_check
      _
    $region15: #{tpu_custom_call.1} parent=1 // pred_check_branch
      %30 = sbr.rel (0) target = $region17
    $region16: #{tpu_custom_call.1} parent=1 // pred_region
      _
    $region17: #{tpu_custom_call.1} parent=1 // pred_fallthru
      _
    // Predicated region
    $region18: #{tpu_custom_call.1} parent=1 // pred_check
      _
    $region19: #{tpu_custom_call.1} parent=1 // pred_check_branch
      %32 = sbr.rel (0) target = $region21
    $region20: #{tpu_custom_call.1} parent=1 // pred_region
      _
    $region21: #{tpu_custom_call.1} parent=1 // pred_fallthru
      _
    // Predicated region
    $region22: #{tpu_custom_call.1} parent=1 // pred_check
      _
    $region23: #{tpu_custom_call.1} parent=1 // pred_check_branch
      %34 = sbr.rel (0) target = $region25
    $region24: #{tpu_custom_call.1} parent=1 // pred_region
      _
    $region25: #{tpu_custom_call.1} parent=1 // pred_fallthru
      _
    // Predicated region
    $region26: #{tpu_custom_call.1} parent=1 // pred_check
      _
    $region27: #{tpu_custom_call.1} parent=1 // pred_check_branch
      %36 = sbr.rel (0) target = $region29
    $region28: #{tpu_custom_call.1} parent=1 // pred_region
      _
    $region29: #{tpu_custom_call.1} parent=1 // pred_fallthru
      _
    // Predicated region
    $region30: #{tpu_custom_call.1} parent=1 // pred_check
      _
    $region31: #{tpu_custom_call.1} parent=1 // pred_check_branch
      %38 = sbr.rel (0) target = $region33
    $region32: #{tpu_custom_call.1} parent=1 // pred_region
      _
    $region33: #{tpu_custom_call.1} parent=1 // pred_fallthru
      _
    // Predicated region
    $region34: #{tpu_custom_call.1} parent=1 // pred_check
      _
    $region35: #{tpu_custom_call.1} parent=1 // pred_check_branch
      %40 = sbr.rel (0) target = $region37
    $region36: #{tpu_custom_call.1} parent=1 // pred_region
      %41 = dma.done [#allocation4], 16
    $region37: #{tpu_custom_call.1} parent=1 // pred_fallthru
      _
    %42 = sfence
    %v44 = vld [vmem:[%s1] sm:$0xf]
    %v45 = vld [vmem:[%s2] sm:$0xff]
    %v46 = vld [vmem:[%s2 + $0x8] sm:$0xff]
    %v47 = vld [vmem:[%s2 + $0x10] sm:$0xff]
    %v48 = vld [vmem:[%s2 + $0x18] sm:$0xff]
    %v49 = vld [vmem:[%s3] sm:$0xff]
    %v50 = vld [vmem:[%s3 + $0x8] sm:$0xff]
    %v51 = vld [vmem:[%s3 + $0x10] sm:$0xff]
    %v52 = vld [vmem:[%s3 + $0x18] sm:$0xff]
    %54 = vset.pattern.permute.xlu0 0
    %55 = vperm.xlu0 %54, %v45
    %v56 = vpop.permute.xlu0 %55
    %59 = vset.pattern.permute.xlu0 0
    %60 = vperm.xlu0 %59, %v46
    %v61 = vpop.permute.xlu0 %60
    %64 = vset.pattern.permute.xlu0 0
    %65 = vperm.xlu0 %64, %v47
    %v66 = vpop.permute.xlu0 %65
    %69 = vset.pattern.permute.xlu0 0
    %70 = vperm.xlu0 %69, %v48
    %v71 = vpop.permute.xlu0 %70
    %v73 = vlaneseq
    %v74 = vshrl.u32 %v73, 7
    %v75 = vsub.s32 0, %v74
    %v76 = vrot.slane %v44, %v75
    %v77 = vmul.f32 %v56, %v76
    %v78 = vmul.f32 %v61, %v76
    %v79 = vmul.f32 %v66, %v76
    %v80 = vmul.f32 %v71, %v76
    %81 = vset.pattern.permute.xlu0 1
    %82 = vperm.xlu0 %81, %v45
    %v83 = vpop.permute.xlu0 %82
    %85 = vset.pattern.permute.xlu0 1
    %86 = vperm.xlu0 %85, %v46
    %v87 = vpop.permute.xlu0 %86
    %89 = vset.pattern.permute.xlu0 1
    %90 = vperm.xlu0 %89, %v47
    %v91 = vpop.permute.xlu0 %90
    %93 = vset.pattern.permute.xlu0 1
    %94 = vperm.xlu0 %93, %v48
    %v95 = vpop.permute.xlu0 %94
    %v97 = vlaneseq
    %v98 = vshrl.u32 %v97, 7
    %v99 = vsub.s32 1, %v98
    %v100 = vrot.slane %v44, %v99
    %v101 = vmul.f32 %v83, %v100
    %v102 = vmul.f32 %v87, %v100
    %v103 = vmul.f32 %v91, %v100
    %v104 = vmul.f32 %v95, %v100
    %v105 = vadd.f32 %v77, %v101
    %v106 = vadd.f32 %v78, %v102
    %v107 = vadd.f32 %v79, %v103
    %v108 = vadd.f32 %v80, %v104
    %109 = vset.pattern.permute.xlu0 2
    %110 = vperm.xlu0 %109, %v45
    %v111 = vpop.permute.xlu0 %110
    %113 = vset.pattern.permute.xlu0 2
    %114 = vperm.xlu0 %113, %v46
    %v115 = vpop.permute.xlu0 %114
    %117 = vset.pattern.permute.xlu0 2
    %118 = vperm.xlu0 %117, %v47
    %v119 = vpop.permute.xlu0 %118
    %121 = vset.pattern.permute.xlu0 2
    %122 = vperm.xlu0 %121, %v48
    %v123 = vpop.permute.xlu0 %122
    %v125 = vlaneseq
    %v126 = vshrl.u32 %v125, 7
    %v127 = vsub.s32 2, %v126
    %v128 = vrot.slane %v44, %v127
    %v129 = vmul.f32 %v111, %v128
    %v130 = vmul.f32 %v115, %v128
    %v131 = vmul.f32 %v119, %v128
    %v132 = vmul.f32 %v123, %v128
    %v133 = vadd.f32 %v105, %v129
    %v134 = vadd.f32 %v106, %v130
    %v135 = vadd.f32 %v107, %v131
    %v136 = vadd.f32 %v108, %v132
    %137 = vset.pattern.permute.xlu0 3
    %138 = vperm.xlu0 %137, %v45
    %v139 = vpop.permute.xlu0 %138
    %141 = vset.pattern.permute.xlu0 3
    %142 = vperm.xlu0 %141, %v46
    %v143 = vpop.permute.xlu0 %142
    %145 = vset.pattern.permute.xlu0 3
    %146 = vperm.xlu0 %145, %v47
    %v147 = vpop.permute.xlu0 %146
    %149 = vset.pattern.permute.xlu0 3
    %150 = vperm.xlu0 %149, %v48
    %v151 = vpop.permute.xlu0 %150
    %v153 = vlaneseq
    %v154 = vshrl.u32 %v153, 7
    %v155 = vsub.s32 3, %v154
    %v156 = vrot.slane %v44, %v155
    %v157 = vmul.f32 %v139, %v156
    %v158 = vmul.f32 %v143, %v156
    %v159 = vmul.f32 %v147, %v156
    %v160 = vmul.f32 %v151, %v156
    %v161 = vadd.f32 %v133, %v157
    %v162 = vadd.f32 %v134, %v158
    %v163 = vadd.f32 %v135, %v159
    %v164 = vadd.f32 %v136, %v160
    %166 = vset.pattern.permute.xlu0 0
    %167 = vperm.xlu0 %166, %v49
    %v168 = vpop.permute.xlu0 %167
    %171 = vset.pattern.permute.xlu0 0
    %172 = vperm.xlu0 %171, %v50
    %v173 = vpop.permute.xlu0 %172
    %176 = vset.pattern.permute.xlu0 0
    %177 = vperm.xlu0 %176, %v51
    %v178 = vpop.permute.xlu0 %177
    %181 = vset.pattern.permute.xlu0 0
    %182 = vperm.xlu0 %181, %v52
    %v183 = vpop.permute.xlu0 %182
    %v185 = vadd.f32 %v161, %v168
    %v186 = vadd.f32 %v162, %v173
    %v187 = vadd.f32 %v163, %v178
    %v188 = vadd.f32 %v164, %v183
    %s189 = sld [smem:[#allocation2]]
    %vm190 = vcmp.gt.f32.partialorder %v185, 0.0
    %vm191 = vcmp.gt.f32.partialorder %v186, 0.0
    %vm192 = vcmp.gt.f32.partialorder %v187, 0.0
    %vm193 = vcmp.gt.f32.partialorder %v188, 0.0
    %v194 = vstv %s189
    %v195 = vmul.f32 %v194, %v185
    %v196 = vmul.f32 %v194, %v186
    %v197 = vmul.f32 %v194, %v187
    %v198 = vmul.f32 %v194, %v188
    %v199 = vsel %vm190, %v185, %v195
    %v200 = vsel %vm191, %v186, %v196
    %v201 = vsel %vm192, %v187, %v197
    %v202 = vsel %vm193, %v188, %v198
    %v203 = vld [vmem:[%s4] sm:$0xff]
    %v204 = vld [vmem:[%s4 + $0x8] sm:$0xff]
    %v205 = vld [vmem:[%s4 + $0x10] sm:$0xff]
    %v206 = vld [vmem:[%s4 + $0x18] sm:$0xff]
    %v207 = vld [vmem:[%s5] sm:$0xff]
    %v208 = vld [vmem:[%s5 + $0x8] sm:$0xff]
    %v209 = vld [vmem:[%s5 + $0x10] sm:$0xff]
    %v210 = vld [vmem:[%s5 + $0x18] sm:$0xff]
    %v211 = vpack.c.bf16 %v204, %v203
    %v212 = vpack.c.bf16 %v206, %v205
    %v213 = vpack.c.bf16 %v200, %v199
    %v214 = vpack.c.bf16 %v202, %v201
    %216 = vset.pattern.permute.xlu0 0
    %217 = vperm.xlu0 %216, %v207
    %v218 = vpop.permute.xlu0 %217
    %221 = vset.pattern.permute.xlu0 0
    %222 = vperm.xlu0 %221, %v208
    %v223 = vpop.permute.xlu0 %222
    %226 = vset.pattern.permute.xlu0 0
    %227 = vperm.xlu0 %226, %v209
    %v228 = vpop.permute.xlu0 %227
    %231 = vset.pattern.permute.xlu0 0
    %232 = vperm.xlu0 %231, %v210
    %v233 = vpop.permute.xlu0 %232
    %vm235 = vcmask 261120
    %v237 = vsel %vm235, %v211, 0
    %v240 = vsel %vm235, %v212, 0
    %242 = vmatprep.subr.bf16.mxu0 0
    %243 = vmatpush1.bf16.msra.mxu0 %v213
    %244 = vmatprep.subr.bf16.mxu0 0
    %245 = vmatpush1.bf16.msra.mxu0 %v214
    %246 = vmatprep.subr.bf16.mxu0 0
    %247 = vmatpush1.bf16.msra.mxu0 0
    %248 = vmatprep.subr.bf16.mxu0 0
    %249 = vmatpush1.bf16.msra.mxu0 0
    %250 = vmatprep.subr.bf16.mxu0 0
    %251 = vmatpush1.bf16.msra.mxu0 0
    %252 = vmatprep.subr.bf16.mxu0 0
    %253 = vmatpush1.bf16.msra.mxu0 0
    %254 = vmatprep.subr.bf16.mxu0 0
    %255 = vmatpush1.bf16.msra.mxu0 0
    %256 = vmatprep.subr.bf16.mxu0 0
    %257 = vmatpush1.bf16.msra.mxu0 0
    %258 = vmatprep.subr.bf16.mxu0 0
    %259 = vmatpush1.bf16.msra.mxu0 0
    %260 = vmatprep.subr.bf16.mxu0 0
    %261 = vmatpush1.bf16.msra.mxu0 0
    %262 = vmatprep.subr.bf16.mxu0 0
    %263 = vmatpush1.bf16.msra.mxu0 0
    %264 = vmatprep.subr.bf16.mxu0 0
    %265 = vmatpush1.bf16.msra.mxu0 0
    %266 = vmatprep.subr.bf16.mxu0 0
    %267 = vmatpush1.bf16.msra.mxu0 0
    %268 = vmatprep.subr.bf16.mxu0 0
    %269 = vmatpush1.bf16.msra.mxu0 0
    %270 = vmatprep.subr.bf16.mxu0 0
    %271 = vmatpush1.bf16.msra.mxu0 0
    %272 = vmatprep.subr.bf16.mxu0 0
    %273 = vmatpush1.bf16.msra.mxu0 0
    %274 = vmatprep.mubr.bf16.mxu0 0
    %275 = vmatmul.mubr.bf16.gmra.mrb[0].mxu0 %v237
    %v276 = vpop.f32.mrb[0].mxu0
    %v277 = vadd.f32 %v218, %v276
    %v278 = vpop.f32.mrb[0].mxu0
    %v279 = vpop.f32.mrb[0].mxu0
    %v280 = vadd.f32 %v223, %v279
    %v281 = vpop.f32.mrb[0].mxu0
    %282 = vmatprep.mubr.bf16.mxu0 0
    %283 = vmatmul.mubr.bf16.gmra.mrb[0].mxu0 %v240
    %v284 = vpop.f32.mrb[0].mxu0
    %v285 = vadd.f32 %v228, %v284
    %v286 = vpop.f32.mrb[0].mxu0
    %v287 = vpop.f32.mrb[0].mxu0
    %v288 = vadd.f32 %v233, %v287
    %v289 = vpop.f32.mrb[0].mxu0
    %290 = vdwg.mxu0
    %s291 = sld [smem:[#allocation2 + $0x1]]
    %vm292 = vcmp.gt.f32.partialorder %v277, 0.0
    %vm293 = vcmp.gt.f32.partialorder %v280, 0.0
    %vm294 = vcmp.gt.f32.partialorder %v285, 0.0
    %vm295 = vcmp.gt.f32.partialorder %v288, 0.0
    %v296 = vstv %s291
    %v297 = vmul.f32 %v296, %v277
    %v298 = vmul.f32 %v296, %v280
    %v299 = vmul.f32 %v296, %v285
    %v300 = vmul.f32 %v296, %v288
    %v301 = vsel %vm292, %v277, %v297
    %v302 = vsel %vm293, %v280, %v298
    %v303 = vsel %vm294, %v285, %v299
    %v304 = vsel %vm295, %v288, %v300
    %v305 = vld [vmem:[%s6] sm:$0x7]
    %v306 = vld [vmem:[%s7] sm:$0x7]
    %v307 = vpack.c.bf16 %v305, %v305
    %v308 = vpack.c.bf16 %v302, %v301
    %v309 = vpack.c.bf16 %v304, %v303
    %311 = vset.pattern.permute.xlu0 0
    %312 = vperm.xlu0 %311, %v306
    %v313 = vpop.permute.xlu0 %312
    %v316 = vsel %vm235, %v307, 0
    %318 = vmatprep.subr.bf16.mxu0 0
    %319 = vmatpush1.bf16.msra.mxu0 %v308
    %320 = vmatprep.subr.bf16.mxu0 0
    %321 = vmatpush1.bf16.msra.mxu0 %v309
    %322 = vmatprep.subr.bf16.mxu0 0
    %323 = vmatpush1.bf16.msra.mxu0 0
    %324 = vmatprep.subr.bf16.mxu0 0
    %325 = vmatpush1.bf16.msra.mxu0 0
    %326 = vmatprep.subr.bf16.mxu0 0
    %327 = vmatpush1.bf16.msra.mxu0 0
    %328 = vmatprep.subr.bf16.mxu0 0
    %329 = vmatpush1.bf16.msra.mxu0 0
    %330 = vmatprep.subr.bf16.mxu0 0
    %331 = vmatpush1.bf16.msra.mxu0 0
    %332 = vmatprep.subr.bf16.mxu0 0
    %333 = vmatpush1.bf16.msra.mxu0 0
    %334 = vmatprep.subr.bf16.mxu0 0
    %335 = vmatpush1.bf16.msra.mxu0 0
    %336 = vmatprep.subr.bf16.mxu0 0
    %337 = vmatpush1.bf16.msra.mxu0 0
    %338 = vmatprep.subr.bf16.mxu0 0
    %339 = vmatpush1.bf16.msra.mxu0 0
    %340 = vmatprep.subr.bf16.mxu0 0
    %341 = vmatpush1.bf16.msra.mxu0 0
    %342 = vmatprep.subr.bf16.mxu0 0
    %343 = vmatpush1.bf16.msra.mxu0 0
    %344 = vmatprep.subr.bf16.mxu0 0
    %345 = vmatpush1.bf16.msra.mxu0 0
    %346 = vmatprep.subr.bf16.mxu0 0
    %347 = vmatpush1.bf16.msra.mxu0 0
    %348 = vmatprep.subr.bf16.mxu0 0
    %349 = vmatpush1.bf16.msra.mxu0 0
    %350 = vmatprep.mubr.bf16.mxu0 0
    %351 = vmatmul.mubr.bf16.gmra.mrb[0].mxu0 %v316
    %v352 = vpop.f32.mrb[0].mxu0
    %v353 = vadd.f32 %v313, %v352
    %v354 = vpop.f32.mrb[0].mxu0
    %v355 = vpop.f32.mrb[0].mxu0
    %v356 = vpop.f32.mrb[0].mxu0
    %357 = vdwg.mxu0
    %358 = vst [vmem:[#allocation5] sm:$0x7] %v353
    // Predicated region
    $region38: #{tpu_custom_call.1} parent=1 // pred_check
      _
    $region39: #{tpu_custom_call.1} parent=1 // pred_check_branch
      %360 = sbr.rel (0) target = $region41
    $region40: #{tpu_custom_call.1} parent=1 // pred_region
      %s362 = ssub.s32 64, 64
      %363 = vsyncadd [#allocation3], %s362
      %s365 = sshll.u32 [#allocation5], 4
      %s366 = int_to_ptr.vmem [resolvable:$true] %s365
      %368 = dma.vmem_to_hbm [thread:$0]  %s366, 64, %s8, [#allocation3]
    $region41: #{tpu_custom_call.1} parent=1 // pred_fallthru
      _
    // Predicated region
    $region42: #{tpu_custom_call.1} parent=1 // pred_check
      _
    $region43: #{tpu_custom_call.1} parent=1 // pred_check_branch
      %370 = sbr.rel (0) target = $region45
    $region44: #{tpu_custom_call.1} parent=1 // pred_region
      %371 = dma.done [#allocation3], 64
    $region45: #{tpu_custom_call.1} parent=1 // pred_fallthru
      _
    %372 = vsyncpa [#allocation3], 1
    %373 = vsyncpa [#allocation4], 1

</llo_original>
